<compile_context>
chip_gen: v5e
topology: v5e:2x2
jax: 0.10.0
libtpu: 0.0.40
codegen_flags: <defaults>
</compile_context>

<pallas_src>
import functools

import jax
import jax.numpy as jnp
from jax.experimental import pallas as pl
from jax.experimental.pallas import tpu as pltpu

LANE = 128     # lane-dense feature padding target
SUBLANE = 8    # sublane-aligned node-count padding


# ----------------------------------------------------------------------------
# Shared helpers
# ----------------------------------------------------------------------------
def _round_up(x, m):
    return ((x + m - 1) // m) * m


def _pad2d(x, rows, cols):
    return jnp.pad(x, ((0, rows - x.shape[0]), (0, cols - x.shape[1])))


# ----------------------------------------------------------------------------
# Layer math (pure jnp) — shared by the Pallas kernel and the matched reference
# so both compute bit-for-bit the same thing.
# ----------------------------------------------------------------------------
def _gcn_layer_math(a, h, w, b, wr, br, *, n_dst, apply_act, has_res_linear):
    """One GCN layer: act(A @ H @ W + b) + residual(H[:n_dst]).

    a  : (n_dst_pad, n_src_pad) bf16 normalized block adjacency (zero padded)
    h  : (n_src_pad, F_pad)     f32 running activation
    w  : (F_pad, F_pad) bf16,   b : (1, F_pad) f32
    wr/br : residual Linear params (bf16 / f32) or None when residual=Identity
    """
    n_src = a.shape[1]
    f_in = h.shape[1]
    f_out = w.shape[1]
    h_mx = h.astype(jnp.bfloat16)

    # Static reassociation choice (exact either way): pick cheaper MXU order.
    cost_agg_first = n_dst * n_src * f_in + n_dst * f_in * f_out     # (A@H)@W
    cost_proj_first = n_src * f_in * f_out + n_dst * n_src * f_out   # A@(H@W)
    if cost_proj_first < cost_agg_first:
        hw = jnp.dot(h_mx, w, preferred_element_type=jnp.float32)        # (n_src, F)
        z = jnp.dot(a, hw.astype(jnp.bfloat16),
                    preferred_element_type=jnp.float32)                  # (n_dst, F)
    else:
        ah = jnp.dot(a, h_mx, preferred_element_type=jnp.float32)        # (n_dst, F)
        z = jnp.dot(ah.astype(jnp.bfloat16), w,
                    preferred_element_type=jnp.float32)                  # (n_dst, F)

    z = z + b                           # bias added once, in f32
    if apply_act:
        z = jnp.maximum(z, 0.0)         # ReLU (GraphConv activation)

    h_res = h[:n_dst, :]                # h[:block.num_dst_nodes()]  (static slice)
    if has_res_linear:
        res = jnp.dot(h_res.astype(jnp.bfloat16), wr,
                      preferred_element_type=jnp.float32) + br
    else:
        # res_linears[-1] is Identity; the in-place `h += h_res` lands inside
        # the returned view, so the identity residual is included.
        res = h_res
    return z + res


# ----------------------------------------------------------------------------
# Fused kernel: all layers in one pallas_call, h stays on-chip between layers.
# ----------------------------------------------------------------------------
def _gcn_fused_kernel(*refs, n_layers, layer_info):
    out_ref = refs[-1]
    in_refs = refs[:-1]
    a_refs = in_refs[:n_layers]
    feat_ref = in_refs[n_layers]
    param_refs = in_refs[n_layers + 1:]

    h = feat_ref[...]                                # (n_src0_pad, F_pad) f32

    p = 0
    for l in range(n_layers):
        n_dst, apply_act, has_res = layer_info[l]
        a = a_refs[l][...]                           # (n_dst_pad, n_src_pad) bf16
        w = param_refs[p][...]                       # (F_pad, F_pad) bf16
        b = param_refs[p + 1][...]                   # (1, F_pad) f32
        p += 2
        if has_res:
            wr = param_refs[p][...]
            br = param_refs[p + 1][...]
            p += 2
        else:
            wr = br = None
        h = _gcn_layer_math(a, h, w, b, wr, br, n_dst=n_dst,
                            apply_act=apply_act, has_res_linear=has_res)

    out_ref[...] = h.astype(out_ref.dtype)           # lane-dense store


# ----------------------------------------------------------------------------
# Padding / flattening shared by the wrapper and the matched reference.
# ----------------------------------------------------------------------------
def _prepare_padded_inputs(block_adjs, feat, params):
    n_layers = len(block_adjs)
    feat_dims = [feat.shape[1]] + [p[0].shape[1] for p in params]
    f_pad = _round_up(max(feat_dims), LANE)

    # node_pads[0] = padded src count of layer 0; node_pads[l+1] = padded dst of l.
    node_pads = [_round_up(block_adjs[0].shape[1], SUBLANE)] + \
                [_round_up(a.shape[0], SUBLANE) for a in block_adjs]

    adjs = [_pad2d(a, node_pads[l + 1], node_pads[l]).astype(jnp.bfloat16)
            for l, a in enumerate(block_adjs)]
    feat_p = _pad2d(feat, node_pads[0], f_pad).astype(jnp.float32)

    flat_params = []
    layer_info = []
    for l, (w, b, wr, br) in enumerate(params):
        last = l == n_layers - 1
        layer_info.append((node_pads[l + 1], not last, not last))
        flat_params += [_pad2d(w, f_pad, f_pad).astype(jnp.bfloat16),
                        _pad2d(b, 1, f_pad).astype(jnp.float32)]
        if not last:
            flat_params += [_pad2d(wr, f_pad, f_pad).astype(jnp.bfloat16),
                            _pad2d(br, 1, f_pad).astype(jnp.float32)]
    return adjs, feat_p, flat_params, tuple(layer_info), f_pad, node_pads


# ----------------------------------------------------------------------------
# Wrapper: pad to lane-dense shapes, build the single pallas_call, slice back.
# ----------------------------------------------------------------------------
def gcn_forward(block_adjs, feat, params):
    """params[l] = (W_l, b_l, Wr_l, br_l); Wr/br are None for the last layer."""
    n_layers = len(block_adjs)
    n_out = block_adjs[-1].shape[0]
    n_classes = params[-1][0].shape[1]

    adjs, feat_p, flat_params, layer_info, f_pad, node_pads = \
        _prepare_padded_inputs(block_adjs, feat, params)

    inputs = list(adjs) + [feat_p] + flat_params
    kernel = functools.partial(_gcn_fused_kernel, n_layers=n_layers,
                               layer_info=layer_info)

    out = pl.pallas_call(
        kernel,
        out_shape=jax.ShapeDtypeStruct((node_pads[-1], f_pad), jnp.float32),
        grid=(1,),
        in_specs=[pl.BlockSpec(x.shape, lambda i: (0, 0)) for x in inputs],
        out_specs=pl.BlockSpec((node_pads[-1], f_pad), lambda i: (0, 0)),
        compiler_params=pltpu.CompilerParams(
            dimension_semantics=("arbitrary",)),
    )(*inputs)

    return out[:n_out, :n_classes]


# ----------------------------------------------------------------------------
# References
# ----------------------------------------------------------------------------
def gcn_forward_matched_ref(block_adjs, feat, params):
    """Plain-JAX reference using the exact same padding / bf16-MXU numerics."""
    n_layers = len(block_adjs)
    n_out = block_adjs[-1].shape[0]
    n_classes = params[-1][0].shape[1]

    adjs, h, flat_params, layer_info, _, _ = \
        _prepare_padded_inputs(block_adjs, feat, params)

    p = 0
    for l in range(n_layers):
        n_dst, apply_act, has_res = layer_info[l]
        w = flat_params[p]
        b = flat_params[p + 1]
        p += 2
        if has_res:
            wr = flat_params[p]
            br = flat_params[p + 1]
            p += 2
        else:
            wr = br = None
        h = _gcn_layer_math(adjs[l], h, w, b, wr, br, n_dst=n_dst,
                            apply_act=apply_act, has_res_linear=has_res)
    return h[:n_out, :n_classes]


def gcn_forward_ref_f32(block_adjs, feat, params):
    """Full-precision f32 semantic reference of the original module."""
    n_layers = len(block_adjs)
    h = feat
    for l, (w, b, wr, br) in enumerate(params):
        last = l == n_layers - 1
        a = block_adjs[l]
        n_dst = a.shape[0]
        h_res = h[:n_dst, :]
        z = a @ h @ w + b
        if not last:
            z = jnp.maximum(z, 0.0)
            res = h_res @ wr + br
        else:
            res = h_res
        h = z + res
    return h


def make_norm_adj(key, n_dst, n_src):
    """Dense symmetrically-normalized block adjacency (norm='both')."""
    adj = (jax.random.uniform(key, (n_dst, n_src)) < 0.3).astype(jnp.float32)
    deg_src = jnp.maximum(adj.sum(axis=0), 1.0)
    deg_dst = jnp.maximum(adj.sum(axis=1), 1.0)
    return adj / jnp.sqrt(deg_src)[None, :] / jnp.sqrt(deg_dst)[:, None]


if __name__ == "__main__":
    # in_feats = n_hidden = n_classes = 32 (n_classes == n_hidden required by
    # the in-place residual); 3 layers; node counts per block 64 -> 48 -> 32 -> 16.
    in_feats, n_hidden, n_classes, n_layers = 32, 32, 32, 3
    node_counts = [64, 48, 32, 16]

    key = jax.random.PRNGKey(0)
    keys = jax.random.split(key, 16)

    block_adjs = [
        make_norm_adj(keys[l], node_counts[l + 1], node_counts[l])
        for l in range(n_layers)
    ]
    feat = jax.random.normal(keys[8], (node_counts[0], in_feats), dtype=jnp.float32)

    def init_linear(k, fan_in, fan_out):
        kw, kb = jax.random.split(k)
        scale = 1.0 / jnp.sqrt(jnp.float32(fan_in))
        w = jax.random.uniform(kw, (fan_in, fan_out), jnp.float32, -scale, scale)
        b = jax.random.uniform(kb, (1, fan_out), jnp.float32, -scale, scale)
        return w, b

    params = []
    dims = [(in_feats, n_hidden)] + [(n_hidden, n_hidden)] * (n_layers - 2) \
           + [(n_hidden, n_classes)]
    for l, (fi, fo) in enumerate(dims):
        w, b = init_linear(keys[9 + l], fi, fo)          # GraphConv weight/bias
        if l < n_layers - 1:
            wr, br = init_linear(keys[12 + l], fi, fo)   # res_linears[l] (Linear)
        else:
            wr, br = None, None                          # res_linears[-1] = Identity
        params.append((w, b, wr, br))

    out = gcn_forward(block_adjs, feat, params)
    out = jax.block_until_ready(out)

    matched = gcn_forward_matched_ref(block_adjs, feat, params)   # same numerics
    ref_f32 = gcn_forward_ref_f32(block_adjs, feat, params)       # semantic check

    assert out.shape == (node_counts[-1], n_classes)
    assert jnp.allclose(out, matched, atol=1e-2, rtol=1e-2), "mismatch vs matched ref"
    assert jnp.allclose(out, ref_f32, atol=1e-1, rtol=1e-1), "mismatch vs f32 ref"

    print("KERNEL_OK")
</pallas_src>

<mosaic_0001>
module attributes {stable_mosaic.version = 11 : i64} {
  func.func @_gcn_fused_kernel(%arg0: i32, %arg1: memref<48x64xbf16, #tpu.memory_space<vmem>>, %arg2: memref<32x48xbf16, #tpu.memory_space<vmem>>, %arg3: memref<16x32xbf16, #tpu.memory_space<vmem>>, %arg4: memref<64x128xf32, #tpu.memory_space<vmem>>, %arg5: memref<128x128xbf16, #tpu.memory_space<vmem>>, %arg6: memref<1x128xf32, #tpu.memory_space<vmem>>, %arg7: memref<128x128xbf16, #tpu.memory_space<vmem>>, %arg8: memref<1x128xf32, #tpu.memory_space<vmem>>, %arg9: memref<128x128xbf16, #tpu.memory_space<vmem>>, %arg10: memref<1x128xf32, #tpu.memory_space<vmem>>, %arg11: memref<128x128xbf16, #tpu.memory_space<vmem>>, %arg12: memref<1x128xf32, #tpu.memory_space<vmem>>, %arg13: memref<128x128xbf16, #tpu.memory_space<vmem>>, %arg14: memref<1x128xf32, #tpu.memory_space<vmem>>, %arg15: memref<16x128xf32, #tpu.memory_space<vmem>>) attributes {dimension_semantics = [#tpu.dimension_semantics<arbitrary>], iteration_bounds = array<i64: 1>, scalar_prefetch = 0 : i64, scratch_operands = 0 : i64, tpu.core_type = #tpu.core_type<tc>, window_params = [{pipeline_mode = #tpu.pipeline_mode<synchronous>, transform_indices = @transform_0, window_bounds = array<i64: 48, 64>}, {pipeline_mode = #tpu.pipeline_mode<synchronous>, transform_indices = @transform_1, window_bounds = array<i64: 32, 48>}, {pipeline_mode = #tpu.pipeline_mode<synchronous>, transform_indices = @transform_2, window_bounds = array<i64: 16, 32>}, {pipeline_mode = #tpu.pipeline_mode<synchronous>, transform_indices = @transform_3, window_bounds = array<i64: 64, 128>}, {pipeline_mode = #tpu.pipeline_mode<synchronous>, transform_indices = @transform_4, window_bounds = array<i64: 128, 128>}, {pipeline_mode = #tpu.pipeline_mode<synchronous>, transform_indices = @transform_5, window_bounds = array<i64: 1, 128>}, {pipeline_mode = #tpu.pipeline_mode<synchronous>, transform_indices = @transform_6, window_bounds = array<i64: 128, 128>}, {pipeline_mode = #tpu.pipeline_mode<synchronous>, transform_indices = @transform_7, window_bounds = array<i64: 1, 128>}, {pipeline_mode = #tpu.pipeline_mode<synchronous>, transform_indices = @transform_8, window_bounds = array<i64: 128, 128>}, {pipeline_mode = #tpu.pipeline_mode<synchronous>, transform_indices = @transform_9, window_bounds = array<i64: 1, 128>}, {pipeline_mode = #tpu.pipeline_mode<synchronous>, transform_indices = @transform_10, window_bounds = array<i64: 128, 128>}, {pipeline_mode = #tpu.pipeline_mode<synchronous>, transform_indices = @transform_11, window_bounds = array<i64: 1, 128>}, {pipeline_mode = #tpu.pipeline_mode<synchronous>, transform_indices = @transform_12, window_bounds = array<i64: 128, 128>}, {pipeline_mode = #tpu.pipeline_mode<synchronous>, transform_indices = @transform_13, window_bounds = array<i64: 1, 128>}, {pipeline_mode = #tpu.pipeline_mode<synchronous>, transform_indices = @transform_14, window_bounds = array<i64: 16, 128>}]} {
    %c0 = arith.constant 0 : index
    %c0_0 = arith.constant 0 : index
    %0 = vector.load %arg4[%c0, %c0_0] : memref<64x128xf32, #tpu.memory_space<vmem>>, vector<64x128xf32>
    %c0_1 = arith.constant 0 : index
    %c0_2 = arith.constant 0 : index
    %1 = vector.load %arg1[%c0_1, %c0_2] : memref<48x64xbf16, #tpu.memory_space<vmem>>, vector<48x64xbf16>
    %c0_3 = arith.constant 0 : index
    %c0_4 = arith.constant 0 : index
    %2 = vector.load %arg5[%c0_3, %c0_4] : memref<128x128xbf16, #tpu.memory_space<vmem>>, vector<128x128xbf16>
    %c0_5 = arith.constant 0 : index
    %c0_6 = arith.constant 0 : index
    %3 = vector.load %arg6[%c0_5, %c0_6] : memref<1x128xf32, #tpu.memory_space<vmem>>, vector<1x128xf32>
    %c0_7 = arith.constant 0 : index
    %c0_8 = arith.constant 0 : index
    %4 = vector.load %arg7[%c0_7, %c0_8] : memref<128x128xbf16, #tpu.memory_space<vmem>>, vector<128x128xbf16>
    %c0_9 = arith.constant 0 : index
    %c0_10 = arith.constant 0 : index
    %5 = vector.load %arg8[%c0_9, %c0_10] : memref<1x128xf32, #tpu.memory_space<vmem>>, vector<1x128xf32>
    %6 = arith.truncf %0 : vector<64x128xf32> to vector<64x128xbf16>
    %cst = arith.constant dense<0.000000e+00> : vector<48x128xf32>
    %7 = tpu.matmul %1, %6, %cst {dimension_numbers = #tpu.dot_dimension_numbers<[1], [0], [0], [1], [0, 0, 1, 1], [], []>} : vector<48x64xbf16>, vector<64x128xbf16>, vector<48x128xf32> -> vector<48x128xf32>
    %8 = arith.truncf %7 : vector<48x128xf32> to vector<48x128xbf16>
    %cst_11 = arith.constant dense<0.000000e+00> : vector<48x128xf32>
    %9 = tpu.matmul %8, %2, %cst_11 {dimension_numbers = #tpu.dot_dimension_numbers<[1], [0], [0], [1], [0, 0, 1, 1], [], []>} : vector<48x128xbf16>, vector<128x128xbf16>, vector<48x128xf32> -> vector<48x128xf32>
    %10 = vector.broadcast %3 : vector<1x128xf32> to vector<48x128xf32>
    %11 = arith.addf %9, %10 : vector<48x128xf32>
    %cst_12 = arith.constant 0.000000e+00 : f32
    %12 = vector.broadcast %cst_12 : f32 to vector<48x128xf32>
    %13 = arith.maximumf %11, %12 : vector<48x128xf32>
    %14 = vector.extract_strided_slice %0 {offsets = [0, 0], sizes = [48, 128], strides = [1, 1]} : vector<64x128xf32> to vector<48x128xf32>
    %15 = arith.truncf %14 : vector<48x128xf32> to vector<48x128xbf16>
    %cst_13 = arith.constant dense<0.000000e+00> : vector<48x128xf32>
    %16 = tpu.matmul %15, %4, %cst_13 {dimension_numbers = #tpu.dot_dimension_numbers<[1], [0], [0], [1], [0, 0, 1, 1], [], []>} : vector<48x128xbf16>, vector<128x128xbf16>, vector<48x128xf32> -> vector<48x128xf32>
    %17 = vector.broadcast %5 : vector<1x128xf32> to vector<48x128xf32>
    %18 = arith.addf %16, %17 : vector<48x128xf32>
    %19 = arith.addf %13, %18 : vector<48x128xf32>
    %c0_14 = arith.constant 0 : index
    %c0_15 = arith.constant 0 : index
    %20 = vector.load %arg2[%c0_14, %c0_15] : memref<32x48xbf16, #tpu.memory_space<vmem>>, vector<32x48xbf16>
    %c0_16 = arith.constant 0 : index
    %c0_17 = arith.constant 0 : index
    %21 = vector.load %arg9[%c0_16, %c0_17] : memref<128x128xbf16, #tpu.memory_space<vmem>>, vector<128x128xbf16>
    %c0_18 = arith.constant 0 : index
    %c0_19 = arith.constant 0 : index
    %22 = vector.load %arg10[%c0_18, %c0_19] : memref<1x128xf32, #tpu.memory_space<vmem>>, vector<1x128xf32>
    %c0_20 = arith.constant 0 : index
    %c0_21 = arith.constant 0 : index
    %23 = vector.load %arg11[%c0_20, %c0_21] : memref<128x128xbf16, #tpu.memory_space<vmem>>, vector<128x128xbf16>
    %c0_22 = arith.constant 0 : index
    %c0_23 = arith.constant 0 : index
    %24 = vector.load %arg12[%c0_22, %c0_23] : memref<1x128xf32, #tpu.memory_space<vmem>>, vector<1x128xf32>
    %25 = arith.truncf %19 : vector<48x128xf32> to vector<48x128xbf16>
    %cst_24 = arith.constant dense<0.000000e+00> : vector<32x128xf32>
    %26 = tpu.matmul %20, %25, %cst_24 {dimension_numbers = #tpu.dot_dimension_numbers<[1], [0], [0], [1], [0, 0, 1, 1], [], []>} : vector<32x48xbf16>, vector<48x128xbf16>, vector<32x128xf32> -> vector<32x128xf32>
    %27 = arith.truncf %26 : vector<32x128xf32> to vector<32x128xbf16>
    %cst_25 = arith.constant dense<0.000000e+00> : vector<32x128xf32>
    %28 = tpu.matmul %27, %21, %cst_25 {dimension_numbers = #tpu.dot_dimension_numbers<[1], [0], [0], [1], [0, 0, 1, 1], [], []>} : vector<32x128xbf16>, vector<128x128xbf16>, vector<32x128xf32> -> vector<32x128xf32>
    %29 = vector.broadcast %22 : vector<1x128xf32> to vector<32x128xf32>
    %30 = arith.addf %28, %29 : vector<32x128xf32>
    %cst_26 = arith.constant 0.000000e+00 : f32
    %31 = vector.broadcast %cst_26 : f32 to vector<32x128xf32>
    %32 = arith.maximumf %30, %31 : vector<32x128xf32>
    %33 = vector.extract_strided_slice %19 {offsets = [0, 0], sizes = [32, 128], strides = [1, 1]} : vector<48x128xf32> to vector<32x128xf32>
    %34 = arith.truncf %33 : vector<32x128xf32> to vector<32x128xbf16>
    %cst_27 = arith.constant dense<0.000000e+00> : vector<32x128xf32>
    %35 = tpu.matmul %34, %23, %cst_27 {dimension_numbers = #tpu.dot_dimension_numbers<[1], [0], [0], [1], [0, 0, 1, 1], [], []>} : vector<32x128xbf16>, vector<128x128xbf16>, vector<32x128xf32> -> vector<32x128xf32>
    %36 = vector.broadcast %24 : vector<1x128xf32> to vector<32x128xf32>
    %37 = arith.addf %35, %36 : vector<32x128xf32>
    %38 = arith.addf %32, %37 : vector<32x128xf32>
    %c0_28 = arith.constant 0 : index
    %c0_29 = arith.constant 0 : index
    %39 = vector.load %arg3[%c0_28, %c0_29] : memref<16x32xbf16, #tpu.memory_space<vmem>>, vector<16x32xbf16>
    %c0_30 = arith.constant 0 : index
    %c0_31 = arith.constant 0 : index
    %40 = vector.load %arg13[%c0_30, %c0_31] : memref<128x128xbf16, #tpu.memory_space<vmem>>, vector<128x128xbf16>
    %c0_32 = arith.constant 0 : index
    %c0_33 = arith.constant 0 : index
    %41 = vector.load %arg14[%c0_32, %c0_33] : memref<1x128xf32, #tpu.memory_space<vmem>>, vector<1x128xf32>
    %42 = arith.truncf %38 : vector<32x128xf32> to vector<32x128xbf16>
    %cst_34 = arith.constant dense<0.000000e+00> : vector<16x128xf32>
    %43 = tpu.matmul %39, %42, %cst_34 {dimension_numbers = #tpu.dot_dimension_numbers<[1], [0], [0], [1], [0, 0, 1, 1], [], []>} : vector<16x32xbf16>, vector<32x128xbf16>, vector<16x128xf32> -> vector<16x128xf32>
    %44 = arith.truncf %43 : vector<16x128xf32> to vector<16x128xbf16>
    %cst_35 = arith.constant dense<0.000000e+00> : vector<16x128xf32>
    %45 = tpu.matmul %44, %40, %cst_35 {dimension_numbers = #tpu.dot_dimension_numbers<[1], [0], [0], [1], [0, 0, 1, 1], [], []>} : vector<16x128xbf16>, vector<128x128xbf16>, vector<16x128xf32> -> vector<16x128xf32>
    %46 = vector.broadcast %41 : vector<1x128xf32> to vector<16x128xf32>
    %47 = arith.addf %45, %46 : vector<16x128xf32>
    %48 = vector.extract_strided_slice %38 {offsets = [0, 0], sizes = [16, 128], strides = [1, 1]} : vector<32x128xf32> to vector<16x128xf32>
    %49 = arith.addf %47, %48 : vector<16x128xf32>
    %c0_36 = arith.constant 0 : index
    %c0_37 = arith.constant 0 : index
    %50 = vector.load %arg15[%c0_36, %c0_37] : memref<16x128xf32, #tpu.memory_space<vmem>>, vector<16x128xf32>
    tpu.vector_store %arg15[%c0_36, %c0_37], %49 {strides = array<i32>} : memref<16x128xf32, #tpu.memory_space<vmem>>, vector<16x128xf32>,
    return
  }
  func.func @transform_0(%arg0: i32) -> (i32, i32) {
    %c0_i32 = arith.constant 0 : i32
    %c0_i32_0 = arith.constant 0 : i32
    %c0_i32_1 = arith.constant 0 : i32
    return %c0_i32, %c0_i32_0 : i32, i32
  }
  func.func @transform_1(%arg0: i32) -> (i32, i32) {
    %c0_i32 = arith.constant 0 : i32
    %c0_i32_0 = arith.constant 0 : i32
    %c0_i32_1 = arith.constant 0 : i32
    return %c0_i32, %c0_i32_0 : i32, i32
  }
  func.func @transform_2(%arg0: i32) -> (i32, i32) {
    %c0_i32 = arith.constant 0 : i32
    %c0_i32_0 = arith.constant 0 : i32
    %c0_i32_1 = arith.constant 0 : i32
    return %c0_i32, %c0_i32_0 : i32, i32
  }
  func.func @transform_3(%arg0: i32) -> (i32, i32) {
    %c0_i32 = arith.constant 0 : i32
    %c0_i32_0 = arith.constant 0 : i32
    %c0_i32_1 = arith.constant 0 : i32
    return %c0_i32, %c0_i32_0 : i32, i32
  }
  func.func @transform_4(%arg0: i32) -> (i32, i32) {
    %c0_i32 = arith.constant 0 : i32
    %c0_i32_0 = arith.constant 0 : i32
    %c0_i32_1 = arith.constant 0 : i32
    return %c0_i32, %c0_i32_0 : i32, i32
  }
  func.func @transform_5(%arg0: i32) -> (i32, i32) {
    %c0_i32 = arith.constant 0 : i32
    %c0_i32_0 = arith.constant 0 : i32
    %c0_i32_1 = arith.constant 0 : i32
    return %c0_i32, %c0_i32_0 : i32, i32
  }
  func.func @transform_6(%arg0: i32) -> (i32, i32) {
    %c0_i32 = arith.constant 0 : i32
    %c0_i32_0 = arith.constant 0 : i32
    %c0_i32_1 = arith.constant 0 : i32
    return %c0_i32, %c0_i32_0 : i32, i32
  }
  func.func @transform_7(%arg0: i32) -> (i32, i32) {
    %c0_i32 = arith.constant 0 : i32
    %c0_i32_0 = arith.constant 0 : i32
    %c0_i32_1 = arith.constant 0 : i32
    return %c0_i32, %c0_i32_0 : i32, i32
  }
  func.func @transform_8(%arg0: i32) -> (i32, i32) {
    %c0_i32 = arith.constant 0 : i32
    %c0_i32_0 = arith.constant 0 : i32
    %c0_i32_1 = arith.constant 0 : i32
    return %c0_i32, %c0_i32_0 : i32, i32
  }
  func.func @transform_9(%arg0: i32) -> (i32, i32) {
    %c0_i32 = arith.constant 0 : i32
    %c0_i32_0 = arith.constant 0 : i32
    %c0_i32_1 = arith.constant 0 : i32
    return %c0_i32, %c0_i32_0 : i32, i32
  }
  func.func @transform_10(%arg0: i32) -> (i32, i32) {
    %c0_i32 = arith.constant 0 : i32
    %c0_i32_0 = arith.constant 0 : i32
    %c0_i32_1 = arith.constant 0 : i32
    return %c0_i32, %c0_i32_0 : i32, i32
  }
  func.func @transform_11(%arg0: i32) -> (i32, i32) {
    %c0_i32 = arith.constant 0 : i32
    %c0_i32_0 = arith.constant 0 : i32
    %c0_i32_1 = arith.constant 0 : i32
    return %c0_i32, %c0_i32_0 : i32, i32
  }
  func.func @transform_12(%arg0: i32) -> (i32, i32) {
    %c0_i32 = arith.constant 0 : i32
    %c0_i32_0 = arith.constant 0 : i32
    %c0_i32_1 = arith.constant 0 : i32
    return %c0_i32, %c0_i32_0 : i32, i32
  }
  func.func @transform_13(%arg0: i32) -> (i32, i32) {
    %c0_i32 = arith.constant 0 : i32
    %c0_i32_0 = arith.constant 0 : i32
    %c0_i32_1 = arith.constant 0 : i32
    return %c0_i32, %c0_i32_0 : i32, i32
  }
  func.func @transform_14(%arg0: i32) -> (i32, i32) {
    %c0_i32 = arith.constant 0 : i32
    %c0_i32_0 = arith.constant 0 : i32
    %c0_i32_1 = arith.constant 0 : i32
    return %c0_i32, %c0_i32_0 : i32, i32
  }
}

</mosaic_0001>

<llo_original>
// kernel: tpu_custom_call.1
$region0: #{tpu_custom_call.1}
  #allocation0 [shape = 'u32[]', space=smem, size = 0x4, offset = 0x4, fixed_abs, tag = 'smem constant byte address 0x4 - core index']
  #allocation1 [shape = 'u32[72,128]{1,0:T(1,128)}', space=vmem, size = 0x9000, scoped, tag = 'internal scratch']
  %s0 = inlined_call_operand.hbm [shape: bf16[48,64], index: 0, kind: input, shape index: {}]
  %s1 = inlined_call_operand.hbm [shape: bf16[32,48], index: 1, kind: input, shape index: {}]
  %s2 = inlined_call_operand.hbm [shape: bf16[16,32], index: 2, kind: input, shape index: {}]
  %s3 = inlined_call_operand.hbm [shape: f32[64,128], index: 3, kind: input, shape index: {}]
  %s4 = inlined_call_operand.hbm [shape: bf16[128,128], index: 4, kind: input, shape index: {}]
  %s5 = inlined_call_operand.vmem [shape: f32[1,128], index: 5, kind: input, shape index: {}]
  %s6 = inlined_call_operand.hbm [shape: bf16[128,128], index: 6, kind: input, shape index: {}]
  %s7 = inlined_call_operand.vmem [shape: f32[1,128], index: 7, kind: input, shape index: {}]
  %s8 = inlined_call_operand.hbm [shape: bf16[128,128], index: 8, kind: input, shape index: {}]
  %s9 = inlined_call_operand.vmem [shape: f32[1,128], index: 9, kind: input, shape index: {}]
  %s10 = inlined_call_operand.hbm [shape: bf16[128,128], index: 10, kind: input, shape index: {}]
  %s11 = inlined_call_operand.vmem [shape: f32[1,128], index: 11, kind: input, shape index: {}]
  %s12 = inlined_call_operand.hbm [shape: bf16[128,128], index: 12, kind: input, shape index: {}]
  %s13 = inlined_call_operand.vmem [shape: f32[1,128], index: 13, kind: input, shape index: {}]
  %s14 = inlined_call_operand.hbm [shape: f32[16,128], index: 14, kind: output, shape index: {}]
  %s15 = sld [smem:[#allocation0]]
  $region102: #{tpu_custom_call.1} parent=0
    _
  %s17 = ssub.s32 1, %s15
  %s18 = scalar_select 0, %s17, %s15
  $region1: #{tpu_custom_call.1} parent=0
    #allocation2 [shape = 'u8[12288]{0}', space=vmem, size = 0x3000, scoped, tag = 'input window, operand 0, single buffered']
    #allocation3 [shape = 's32[1]{0}', space=sflag, size = 0x4, scoped, tag = 'scoped memory for tpu_custom_call.1']
    #allocation4 [shape = 's32[1]{0}', space=sflag, size = 0x4, scoped, tag = 'scoped memory for tpu_custom_call.1']
    #allocation5 [shape = 'u8[8192]{0}', space=vmem, size = 0x2000, scoped, tag = 'input window, operand 1, single buffered']
    #allocation6 [shape = 's32[1]{0}', space=sflag, size = 0x4, scoped, tag = 'scoped memory for tpu_custom_call.1']
    #allocation7 [shape = 'u8[4096]{0}', space=vmem, size = 0x1000, scoped, tag = 'input window, operand 2, single buffered']
    #allocation8 [shape = 'u8[32768]{0}', space=vmem, size = 0x8000, scoped, tag = 'input window, operand 3, single buffered']
    #allocation9 [shape = 's32[1]{0}', space=sflag, size = 0x4, scoped, tag = 'scoped memory for tpu_custom_call.1']
    #allocation10 [shape = 'u8[32768]{0}', space=vmem, size = 0x8000, scoped, tag = 'input window, operand 4, single buffered']
    #allocation11 [shape = 'u8[32768]{0}', space=vmem, size = 0x8000, scoped, tag = 'input window, operand 6, single buffered']
    #allocation12 [shape = 's32[1]{0}', space=sflag, size = 0x4, scoped, tag = 'scoped memory for tpu_custom_call.1']
    #allocation13 [shape = 'u8[32768]{0}', space=vmem, size = 0x8000, scoped, tag = 'input window, operand 8, single buffered']
    #allocation14 [shape = 'u8[32768]{0}', space=vmem, size = 0x8000, scoped, tag = 'input window, operand 10, single buffered']
    #allocation15 [shape = 's32[1]{0}', space=sflag, size = 0x4, scoped, tag = 'scoped memory for tpu_custom_call.1']
    #allocation16 [shape = 'u8[32768]{0}', space=vmem, size = 0x8000, scoped, tag = 'input window, operand 12, single buffered']
    #allocation17 [shape = 'u8[8192]{0}', space=vmem, size = 0x2000, scoped, tag = 'output window, operand 0, single buffered']
    %19 = vsyncpa [#allocation3], 0
    %20 = vsyncpa [#allocation6], 0
    %21 = vsyncpa [#allocation9], 0
    %22 = vsyncpa [#allocation12], 0
    %23 = vsyncpa [#allocation15], 0
    %24 = vsyncpa [#allocation4], 0
    // Predicated region
    $region2: #{tpu_custom_call.1} parent=1 // pred_check
      _
    $region3: #{tpu_custom_call.1} parent=1 // pred_check_branch
      %26 = sbr.rel (0) target = $region5
    $region4: #{tpu_custom_call.1} parent=1 // pred_region
      %28 = vsyncadd [#allocation3], 0
      %s29 = sshll.u32 %s0, 4
      %s30 = int_to_ptr.hbm [resolvable:$true] %s29
      %s31 = sshll.u32 [#allocation2], 4
      %s32 = int_to_ptr.vmem [resolvable:$true] %s31
      %37 = dma.hbm_to_vmem [thread:$0]  %s30, 384, %s32, [#allocation3], 64, 64, 4
    $region5: #{tpu_custom_call.1} parent=1 // pred_fallthru
      _
    // Predicated region
    $region6: #{tpu_custom_call.1} parent=1 // pred_check
      _
    $region7: #{tpu_custom_call.1} parent=1 // pred_check_branch
      %39 = sbr.rel (0) target = $region9
    $region8: #{tpu_custom_call.1} parent=1 // pred_region
      %41 = vsyncadd [#allocation6], 0
      %s42 = sshll.u32 %s1, 4
      %s43 = int_to_ptr.hbm [resolvable:$true] %s42
      %s44 = sshll.u32 [#allocation5], 4
      %s45 = int_to_ptr.vmem [resolvable:$true] %s44
      %50 = dma.hbm_to_vmem [thread:$0]  %s43, 256, %s45, [#allocation6], 64, 64, 4
    $region9: #{tpu_custom_call.1} parent=1 // pred_fallthru
      _
    // Predicated region
    $region10: #{tpu_custom_call.1} parent=1 // pred_check
      _
    $region11: #{tpu_custom_call.1} parent=1 // pred_check_branch
      %52 = sbr.rel (0) target = $region13
    $region12: #{tpu_custom_call.1} parent=1 // pred_region
      %54 = vsyncadd [#allocation6], 0
      %s55 = sshll.u32 %s2, 4
      %s56 = int_to_ptr.hbm [resolvable:$true] %s55
      %s57 = sshll.u32 [#allocation7], 4
      %s58 = int_to_ptr.vmem [resolvable:$true] %s57
      %63 = dma.hbm_to_vmem [thread:$0]  %s56, 128, %s58, [#allocation6], 64, 64, 4
    $region13: #{tpu_custom_call.1} parent=1 // pred_fallthru
      _
    // Predicated region
    $region14: #{tpu_custom_call.1} parent=1 // pred_check
      _
    $region15: #{tpu_custom_call.1} parent=1 // pred_check_branch
      %65 = sbr.rel (0) target = $region17
    $region16: #{tpu_custom_call.1} parent=1 // pred_region
      %67 = vsyncadd [#allocation9], 0
      %s68 = sshll.u32 %s3, 4
      %s69 = int_to_ptr.hbm [resolvable:$true] %s68
      %s70 = sshll.u32 [#allocation8], 4
      %s71 = int_to_ptr.vmem [resolvable:$true] %s70
      %76 = dma.hbm_to_vmem [thread:$0]  %s69, 1024, %s71, [#allocation9], 128, 128, 8
    $region17: #{tpu_custom_call.1} parent=1 // pred_fallthru
      _
    // Predicated region
    $region18: #{tpu_custom_call.1} parent=1 // pred_check
      _
    $region19: #{tpu_custom_call.1} parent=1 // pred_check_branch
      %78 = sbr.rel (0) target = $region21
    $region20: #{tpu_custom_call.1} parent=1 // pred_region
      %80 = vsyncadd [#allocation9], 0
      %s81 = sshll.u32 %s4, 4
      %s82 = int_to_ptr.hbm [resolvable:$true] %s81
      %s83 = sshll.u32 [#allocation10], 4
      %s84 = int_to_ptr.vmem [resolvable:$true] %s83
      %89 = dma.hbm_to_vmem [thread:$0]  %s82, 1024, %s84, [#allocation9], 64, 64, 4
    $region21: #{tpu_custom_call.1} parent=1 // pred_fallthru
      _
    // Predicated region
    $region22: #{tpu_custom_call.1} parent=1 // pred_check
      _
    $region23: #{tpu_custom_call.1} parent=1 // pred_check_branch
      %91 = sbr.rel (0) target = $region25
    $region24: #{tpu_custom_call.1} parent=1 // pred_region
      _
    $region25: #{tpu_custom_call.1} parent=1 // pred_fallthru
      _
    // Predicated region
    $region26: #{tpu_custom_call.1} parent=1 // pred_check
      _
    $region27: #{tpu_custom_call.1} parent=1 // pred_check_branch
      %93 = sbr.rel (0) target = $region29
    $region28: #{tpu_custom_call.1} parent=1 // pred_region
      %95 = vsyncadd [#allocation12], 0
      %s96 = sshll.u32 %s6, 4
      %s97 = int_to_ptr.hbm [resolvable:$true] %s96
      %s98 = sshll.u32 [#allocation11], 4
      %s99 = int_to_ptr.vmem [resolvable:$true] %s98
      %104 = dma.hbm_to_vmem [thread:$0]  %s97, 1024, %s99, [#allocation12], 64, 64, 4
    $region29: #{tpu_custom_call.1} parent=1 // pred_fallthru
      _
    // Predicated region
    $region30: #{tpu_custom_call.1} parent=1 // pred_check
      _
    $region31: #{tpu_custom_call.1} parent=1 // pred_check_branch
      %106 = sbr.rel (0) target = $region33
    $region32: #{tpu_custom_call.1} parent=1 // pred_region
      _
    $region33: #{tpu_custom_call.1} parent=1 // pred_fallthru
      _
    // Predicated region
    $region34: #{tpu_custom_call.1} parent=1 // pred_check
      _
    $region35: #{tpu_custom_call.1} parent=1 // pred_check_branch
      %108 = sbr.rel (0) target = $region37
    $region36: #{tpu_custom_call.1} parent=1 // pred_region
      %110 = vsyncadd [#allocation12], 0
      %s111 = sshll.u32 %s8, 4
      %s112 = int_to_ptr.hbm [resolvable:$true] %s111
      %s113 = sshll.u32 [#allocation13], 4
      %s114 = int_to_ptr.vmem [resolvable:$true] %s113
      %119 = dma.hbm_to_vmem [thread:$0]  %s112, 1024, %s114, [#allocation12], 64, 64, 4
    $region37: #{tpu_custom_call.1} parent=1 // pred_fallthru
      _
    // Predicated region
    $region38: #{tpu_custom_call.1} parent=1 // pred_check
      _
    $region39: #{tpu_custom_call.1} parent=1 // pred_check_branch
      %121 = sbr.rel (0) target = $region41
    $region40: #{tpu_custom_call.1} parent=1 // pred_region
      _
    $region41: #{tpu_custom_call.1} parent=1 // pred_fallthru
      _
    // Predicated region
    $region42: #{tpu_custom_call.1} parent=1 // pred_check
      _
    $region43: #{tpu_custom_call.1} parent=1 // pred_check_branch
      %123 = sbr.rel (0) target = $region45
    $region44: #{tpu_custom_call.1} parent=1 // pred_region
      %125 = vsyncadd [#allocation15], 0
      %s126 = sshll.u32 %s10, 4
      %s127 = int_to_ptr.hbm [resolvable:$true] %s126
      %s128 = sshll.u32 [#allocation14], 4
      %s129 = int_to_ptr.vmem [resolvable:$true] %s128
      %134 = dma.hbm_to_vmem [thread:$0]  %s127, 1024, %s129, [#allocation15], 64, 64, 4
    $region45: #{tpu_custom_call.1} parent=1 // pred_fallthru
      _
    // Predicated region
    $region46: #{tpu_custom_call.1} parent=1 // pred_check
      _
    $region47: #{tpu_custom_call.1} parent=1 // pred_check_branch
      %136 = sbr.rel (0) target = $region49
    $region48: #{tpu_custom_call.1} parent=1 // pred_region
      _
    $region49: #{tpu_custom_call.1} parent=1 // pred_fallthru
      _
    // Predicated region
    $region50: #{tpu_custom_call.1} parent=1 // pred_check
      _
    $region51: #{tpu_custom_call.1} parent=1 // pred_check_branch
      %138 = sbr.rel (0) target = $region53
    $region52: #{tpu_custom_call.1} parent=1 // pred_region
      %140 = vsyncadd [#allocation15], 0
      %s141 = sshll.u32 %s12, 4
      %s142 = int_to_ptr.hbm [resolvable:$true] %s141
      %s143 = sshll.u32 [#allocation16], 4
      %s144 = int_to_ptr.vmem [resolvable:$true] %s143
      %149 = dma.hbm_to_vmem [thread:$0]  %s142, 1024, %s144, [#allocation15], 64, 64, 4
    $region53: #{tpu_custom_call.1} parent=1 // pred_fallthru
      _
    // Predicated region
    $region54: #{tpu_custom_call.1} parent=1 // pred_check
      _
    $region55: #{tpu_custom_call.1} parent=1 // pred_check_branch
      %151 = sbr.rel (0) target = $region57
    $region56: #{tpu_custom_call.1} parent=1 // pred_region
      _
    $region57: #{tpu_custom_call.1} parent=1 // pred_fallthru
      _
    // Predicated region
    $region58: #{tpu_custom_call.1} parent=1 // pred_check
      _
    $region59: #{tpu_custom_call.1} parent=1 // pred_check_branch
      %153 = sbr.rel (0) target = $region61
    $region60: #{tpu_custom_call.1} parent=1 // pred_region
      %155 = dma.done [#allocation3], 384
    $region61: #{tpu_custom_call.1} parent=1 // pred_fallthru
      _
    // Predicated region
    $region62: #{tpu_custom_call.1} parent=1 // pred_check
      _
    $region63: #{tpu_custom_call.1} parent=1 // pred_check_branch
      %157 = sbr.rel (0) target = $region65
    $region64: #{tpu_custom_call.1} parent=1 // pred_region
      %159 = dma.done [#allocation6], 256
    $region65: #{tpu_custom_call.1} parent=1 // pred_fallthru
      _
    // Predicated region
    $region66: #{tpu_custom_call.1} parent=1 // pred_check
      _
    $region67: #{tpu_custom_call.1} parent=1 // pred_check_branch
      %161 = sbr.rel (0) target = $region69
    $region68: #{tpu_custom_call.1} parent=1 // pred_region
      %163 = dma.done [#allocation6], 128
    $region69: #{tpu_custom_call.1} parent=1 // pred_fallthru
      _
    // Predicated region
    $region70: #{tpu_custom_call.1} parent=1 // pred_check
      _
    $region71: #{tpu_custom_call.1} parent=1 // pred_check_branch
      %165 = sbr.rel (0) target = $region73
    $region72: #{tpu_custom_call.1} parent=1 // pred_region
      %167 = dma.done [#allocation9], 1024
    $region73: #{tpu_custom_call.1} parent=1 // pred_fallthru
      _
    // Predicated region
    $region74: #{tpu_custom_call.1} parent=1 // pred_check
      _
    $region75: #{tpu_custom_call.1} parent=1 // pred_check_branch
      %169 = sbr.rel (0) target = $region77
    $region76: #{tpu_custom_call.1} parent=1 // pred_region
      %171 = dma.done [#allocation9], 1024
    $region77: #{tpu_custom_call.1} parent=1 // pred_fallthru
      _
    // Predicated region
    $region78: #{tpu_custom_call.1} parent=1 // pred_check
      _
    $region79: #{tpu_custom_call.1} parent=1 // pred_check_branch
      %173 = sbr.rel (0) target = $region81
    $region80: #{tpu_custom_call.1} parent=1 // pred_region
      %175 = dma.done [#allocation12], 1024
    $region81: #{tpu_custom_call.1} parent=1 // pred_fallthru
      _
    // Predicated region
    $region82: #{tpu_custom_call.1} parent=1 // pred_check
      _
    $region83: #{tpu_custom_call.1} parent=1 // pred_check_branch
      %177 = sbr.rel (0) target = $region85
    $region84: #{tpu_custom_call.1} parent=1 // pred_region
      %179 = dma.done [#allocation12], 1024
    $region85: #{tpu_custom_call.1} parent=1 // pred_fallthru
      _
    // Predicated region
    $region86: #{tpu_custom_call.1} parent=1 // pred_check
      _
    $region87: #{tpu_custom_call.1} parent=1 // pred_check_branch
      %181 = sbr.rel (0) target = $region89
    $region88: #{tpu_custom_call.1} parent=1 // pred_region
      %183 = dma.done [#allocation15], 1024
    $region89: #{tpu_custom_call.1} parent=1 // pred_fallthru
      _
    // Predicated region
    $region90: #{tpu_custom_call.1} parent=1 // pred_check
      _
    $region91: #{tpu_custom_call.1} parent=1 // pred_check_branch
      %185 = sbr.rel (0) target = $region93
    $region92: #{tpu_custom_call.1} parent=1 // pred_region
      %187 = dma.done [#allocation15], 1024
    $region93: #{tpu_custom_call.1} parent=1 // pred_fallthru
      _
    %v189 = vld [vmem:[#allocation8] sm:$0xff]
    %v190 = vld [vmem:[#allocation8 + $0x8] sm:$0xff]
    %v191 = vld [vmem:[#allocation8 + $0x10] sm:$0xff]
    %v192 = vld [vmem:[#allocation8 + $0x18] sm:$0xff]
    %v193 = vld [vmem:[#allocation8 + $0x20] sm:$0xff]
    %v194 = vld [vmem:[#allocation8 + $0x28] sm:$0xff]
    %v195 = vld [vmem:[#allocation8 + $0x30] sm:$0xff]
    %v196 = vld [vmem:[#allocation8 + $0x38] sm:$0xff]
    %v197 = vld [vmem:[#allocation2] sm:$0xf]
    %v198 = vld [vmem:[#allocation2 + $0x4] sm:$0xf]
    %v199 = vld [vmem:[#allocation2 + $0x8] sm:$0xf]
    %v200 = vld [vmem:[#allocation2 + $0xc] sm:$0xf]
    %v201 = vld [vmem:[#allocation2 + $0x10] sm:$0xf]
    %v202 = vld [vmem:[#allocation2 + $0x14] sm:$0xf]
    %v203 = vld [vmem:[#allocation10] sm:$0xf]
    %v204 = vld [vmem:[#allocation10 + $0x4] sm:$0xf]
    %v205 = vld [vmem:[#allocation10 + $0x8] sm:$0xf]
    %v206 = vld [vmem:[#allocation10 + $0xc] sm:$0xf]
    %v207 = vld [vmem:[#allocation10 + $0x10] sm:$0xf]
    %v208 = vld [vmem:[#allocation10 + $0x14] sm:$0xf]
    %v209 = vld [vmem:[#allocation10 + $0x18] sm:$0xf]
    %v210 = vld [vmem:[#allocation10 + $0x1c] sm:$0xf]
    %v211 = vld [vmem:[#allocation10 + $0x20] sm:$0xf]
    %v212 = vld [vmem:[#allocation10 + $0x24] sm:$0xf]
    %v213 = vld [vmem:[#allocation10 + $0x28] sm:$0xf]
    %v214 = vld [vmem:[#allocation10 + $0x2c] sm:$0xf]
    %v215 = vld [vmem:[#allocation10 + $0x30] sm:$0xf]
    %v216 = vld [vmem:[#allocation10 + $0x34] sm:$0xf]
    %v217 = vld [vmem:[#allocation10 + $0x38] sm:$0xf]
    %v218 = vld [vmem:[#allocation10 + $0x3c] sm:$0xf]
    %v219 = vld [vmem:[%s5] sm:$0x1]
    %v220 = vld [vmem:[#allocation11] sm:$0xf]
    %v221 = vld [vmem:[#allocation11 + $0x4] sm:$0xf]
    %v222 = vld [vmem:[#allocation11 + $0x8] sm:$0xf]
    %v223 = vld [vmem:[#allocation11 + $0xc] sm:$0xf]
    %v224 = vld [vmem:[#allocation11 + $0x10] sm:$0xf]
    %v225 = vld [vmem:[#allocation11 + $0x14] sm:$0xf]
    %v226 = vld [vmem:[#allocation11 + $0x18] sm:$0xf]
    %v227 = vld [vmem:[#allocation11 + $0x1c] sm:$0xf]
    %v228 = vld [vmem:[#allocation11 + $0x20] sm:$0xf]
    %v229 = vld [vmem:[#allocation11 + $0x24] sm:$0xf]
    %v230 = vld [vmem:[#allocation11 + $0x28] sm:$0xf]
    %v231 = vld [vmem:[#allocation11 + $0x2c] sm:$0xf]
    %v232 = vld [vmem:[#allocation11 + $0x30] sm:$0xf]
    %v233 = vld [vmem:[#allocation11 + $0x34] sm:$0xf]
    %v234 = vld [vmem:[#allocation11 + $0x38] sm:$0xf]
    %v235 = vld [vmem:[#allocation11 + $0x3c] sm:$0xf]
    %v236 = vld [vmem:[%s7] sm:$0x1]
    %v237 = vpack.c.bf16 %v190, %v189
    %v238 = vpack.c.bf16 %v192, %v191
    %v239 = vpack.c.bf16 %v194, %v193
    %v240 = vpack.c.bf16 %v196, %v195
    %v247 = vunpack.c.l.b16 %v197
    %v248 = vunpack.c.l.b16 %v198
    %v249 = vunpack.c.l.b16 %v199
    %v250 = vunpack.c.l.b16 %v200
    %v251 = vunpack.c.l.b16 %v201
    %v252 = vunpack.c.l.b16 %v202
    %v253 = vpack.c.b16 %v248, %v247
    %v254 = vpack.c.b16 %v250, %v249
    %v255 = vpack.c.b16 %v252, %v251
    %vm256 = vcmask 523264
    %v258 = vsel %vm256, %v253, 0
    %v261 = vsel %vm256, %v254, 0
    %v264 = vsel %vm256, %v255, 0
    %266 = vmatpush.bf16.msra.mxu0 0
    %267 = vmatpush.bf16.msra.mxu0 0
    %268 = vmatpush.bf16.msra.mxu0 0
    %269 = vmatpush.bf16.msra.mxu0 0
    %270 = vmatpush.bf16.msra.mxu0 %v240
    %271 = vmatpush.bf16.msra.mxu0 %v239
    %272 = vmatpush.bf16.msra.mxu0 %v238
    %273 = vmatpush.bf16.msra.mxu0 %v237
    %274 = vmatmul.bf16.gmra.mxu0 %v258
    %v275 = vpop.f32.mrf.mxu0
    %v276 = vadd.f32 0.0, %v275
    %v277 = vpop.f32.mrf.mxu0
    %v278 = vadd.f32 0.0, %v277
    %279 = vmatmul.bf16.gmra.mxu0 %v261
    %v280 = vpop.f32.mrf.mxu0
    %v281 = vadd.f32 0.0, %v280
    %v282 = vpop.f32.mrf.mxu0
    %v283 = vadd.f32 0.0, %v282
    %284 = vmatmul.bf16.gmra.mxu0 %v264
    %v285 = vpop.f32.mrf.mxu0
    %v286 = vadd.f32 0.0, %v285
    %v287 = vpop.f32.mrf.mxu0
    %v288 = vadd.f32 0.0, %v287
    %289 = vdwg.mxu0
    %v290 = vpack.c.bf16 %v278, %v276
    %v291 = vpack.c.bf16 %v283, %v281
    %v292 = vpack.c.bf16 %v288, %v286
    %v294 = vperm.slane %v219, 0
    %v312 = vunpack.c.l.b16 %v203
    %v313 = vunpack.c.l.b16 %v204
    %v314 = vunpack.c.l.b16 %v205
    %v315 = vunpack.c.l.b16 %v206
    %v316 = vunpack.c.l.b16 %v207
    %v317 = vunpack.c.l.b16 %v208
    %v318 = vunpack.c.l.b16 %v209
    %v319 = vunpack.c.l.b16 %v210
    %v320 = vunpack.c.l.b16 %v211
    %v321 = vunpack.c.l.b16 %v212
    %v322 = vunpack.c.l.b16 %v213
    %v323 = vunpack.c.l.b16 %v214
    %v324 = vunpack.c.l.b16 %v215
    %v325 = vunpack.c.l.b16 %v216
    %v326 = vunpack.c.l.b16 %v217
    %v327 = vunpack.c.l.b16 %v218
    %v328 = vpack.c.b16 %v313, %v312
    %v329 = vpack.c.b16 %v315, %v314
    %v330 = vpack.c.b16 %v317, %v316
    %v331 = vpack.c.b16 %v319, %v318
    %v332 = vpack.c.b16 %v321, %v320
    %v333 = vpack.c.b16 %v323, %v322
    %v334 = vpack.c.b16 %v325, %v324
    %v335 = vpack.c.b16 %v327, %v326
    %344 = vmatpush.bf16.msra.mxu0 %v335
    %345 = vmatpush.bf16.msra.mxu0 %v334
    %346 = vmatpush.bf16.msra.mxu0 %v333
    %347 = vmatpush.bf16.msra.mxu0 %v332
    %348 = vmatpush.bf16.msra.mxu0 %v331
    %349 = vmatpush.bf16.msra.mxu0 %v330
    %350 = vmatpush.bf16.msra.mxu0 %v329
    %351 = vmatpush.bf16.msra.mxu0 %v328
    %352 = vmatmul.bf16.gmra.mxu0 %v290
    %v353 = vpop.f32.mrf.mxu0
    %v354 = vadd.f32 %v294, %v353
    %v355 = vpop.f32.mrf.mxu0
    %v356 = vadd.f32 %v294, %v355
    %357 = vmatmul.bf16.gmra.mxu0 %v291
    %v358 = vpop.f32.mrf.mxu0
    %v359 = vadd.f32 %v294, %v358
    %v360 = vpop.f32.mrf.mxu0
    %v361 = vadd.f32 %v294, %v360
    %362 = vmatmul.bf16.gmra.mxu0 %v292
    %v363 = vpop.f32.mrf.mxu0
    %v364 = vadd.f32 %v294, %v363
    %v365 = vpop.f32.mrf.mxu0
    %v366 = vadd.f32 %v294, %v365
    %367 = vdwg.mxu0
    %v368 = vmax.f32 %v354, 0.0
    %v369 = vmax.f32 %v356, 0.0
    %v370 = vmax.f32 %v359, 0.0
    %v371 = vmax.f32 %v361, 0.0
    %v372 = vmax.f32 %v364, 0.0
    %v373 = vmax.f32 %v366, 0.0
    %v375 = vperm.slane %v236, 0
    %v393 = vunpack.c.l.b16 %v220
    %v394 = vunpack.c.l.b16 %v221
    %v395 = vunpack.c.l.b16 %v222
    %v396 = vunpack.c.l.b16 %v223
    %v397 = vunpack.c.l.b16 %v224
    %v398 = vunpack.c.l.b16 %v225
    %v399 = vunpack.c.l.b16 %v226
    %v400 = vunpack.c.l.b16 %v227
    %v401 = vunpack.c.l.b16 %v228
    %v402 = vunpack.c.l.b16 %v229
    %v403 = vunpack.c.l.b16 %v230
    %v404 = vunpack.c.l.b16 %v231
    %v405 = vunpack.c.l.b16 %v232
    %v406 = vunpack.c.l.b16 %v233
    %v407 = vunpack.c.l.b16 %v234
    %v408 = vunpack.c.l.b16 %v235
    %v409 = vpack.c.b16 %v394, %v393
    %v410 = vpack.c.b16 %v396, %v395
    %v411 = vpack.c.b16 %v398, %v397
    %v412 = vpack.c.b16 %v400, %v399
    %v413 = vpack.c.b16 %v402, %v401
    %v414 = vpack.c.b16 %v404, %v403
    %v415 = vpack.c.b16 %v406, %v405
    %v416 = vpack.c.b16 %v408, %v407
    %425 = vmatpush.bf16.msra.mxu0 %v416
    %426 = vmatpush.bf16.msra.mxu0 %v415
    %427 = vmatpush.bf16.msra.mxu0 %v414
    %428 = vmatpush.bf16.msra.mxu0 %v413
    %429 = vmatpush.bf16.msra.mxu0 %v412
    %430 = vmatpush.bf16.msra.mxu0 %v411
    %431 = vmatpush.bf16.msra.mxu0 %v410
    %432 = vmatpush.bf16.msra.mxu0 %v409
    %433 = vmatmul.bf16.gmra.mxu0 %v237
    %v434 = vpop.f32.mrf.mxu0
    %v435 = vadd.f32 %v375, %v434
    %v436 = vpop.f32.mrf.mxu0
    %v437 = vadd.f32 %v375, %v436
    %438 = vmatmul.bf16.gmra.mxu0 %v238
    %v439 = vpop.f32.mrf.mxu0
    %v440 = vadd.f32 %v375, %v439
    %v441 = vpop.f32.mrf.mxu0
    %v442 = vadd.f32 %v375, %v441
    %443 = vmatmul.bf16.gmra.mxu0 %v239
    %v444 = vpop.f32.mrf.mxu0
    %v445 = vadd.f32 %v375, %v444
    %v446 = vpop.f32.mrf.mxu0
    %v447 = vadd.f32 %v375, %v446
    %448 = vdwg.mxu0
    %v449 = vadd.f32 %v368, %v435
    %v450 = vadd.f32 %v369, %v437
    %v451 = vadd.f32 %v370, %v440
    %v452 = vadd.f32 %v371, %v442
    %v453 = vadd.f32 %v372, %v445
    %v454 = vadd.f32 %v373, %v447
    %v455 = vld [vmem:[#allocation5] sm:$0xf]
    %v456 = vld [vmem:[#allocation5 + $0x4] sm:$0xf]
    %v457 = vld [vmem:[#allocation5 + $0x8] sm:$0xf]
    %v458 = vld [vmem:[#allocation5 + $0xc] sm:$0xf]
    %v459 = vld [vmem:[#allocation13] sm:$0xf]
    %v460 = vld [vmem:[#allocation13 + $0x4] sm:$0xf]
    %v461 = vld [vmem:[#allocation13 + $0x8] sm:$0xf]
    %v462 = vld [vmem:[#allocation13 + $0xc] sm:$0xf]
    %v463 = vld [vmem:[#allocation13 + $0x10] sm:$0xf]
    %v464 = vld [vmem:[#allocation13 + $0x14] sm:$0xf]
    %v465 = vld [vmem:[#allocation13 + $0x18] sm:$0xf]
    %v466 = vld [vmem:[#allocation13 + $0x1c] sm:$0xf]
    %v467 = vld [vmem:[#allocation13 + $0x20] sm:$0xf]
    %v468 = vld [vmem:[#allocation13 + $0x24] sm:$0xf]
    %v469 = vld [vmem:[#allocation13 + $0x28] sm:$0xf]
    %v470 = vld [vmem:[#allocation13 + $0x2c] sm:$0xf]
    %v471 = vld [vmem:[#allocation13 + $0x30] sm:$0xf]
    %v472 = vld [vmem:[#allocation13 + $0x34] sm:$0xf]
    %v473 = vld [vmem:[#allocation13 + $0x38] sm:$0xf]
    %v474 = vld [vmem:[#allocation13 + $0x3c] sm:$0xf]
    %v475 = vld [vmem:[%s9] sm:$0x1]
    %v476 = vld [vmem:[#allocation14] sm:$0xf]
    %v477 = vld [vmem:[#allocation14 + $0x4] sm:$0xf]
    %v478 = vld [vmem:[#allocation14 + $0x8] sm:$0xf]
    %v479 = vld [vmem:[#allocation14 + $0xc] sm:$0xf]
    %v480 = vld [vmem:[#allocation14 + $0x10] sm:$0xf]
    %v481 = vld [vmem:[#allocation14 + $0x14] sm:$0xf]
    %v482 = vld [vmem:[#allocation14 + $0x18] sm:$0xf]
    %v483 = vld [vmem:[#allocation14 + $0x1c] sm:$0xf]
    %v484 = vld [vmem:[#allocation14 + $0x20] sm:$0xf]
    %v485 = vld [vmem:[#allocation14 + $0x24] sm:$0xf]
    %v486 = vld [vmem:[#allocation14 + $0x28] sm:$0xf]
    %v487 = vld [vmem:[#allocation14 + $0x2c] sm:$0xf]
    %v488 = vld [vmem:[#allocation14 + $0x30] sm:$0xf]
    %v489 = vld [vmem:[#allocation14 + $0x34] sm:$0xf]
    %v490 = vld [vmem:[#allocation14 + $0x38] sm:$0xf]
    %v491 = vld [vmem:[#allocation14 + $0x3c] sm:$0xf]
    %v492 = vld [vmem:[%s11] sm:$0x1]
    %v493 = vpack.c.bf16 %v450, %v449
    %v494 = vpack.c.bf16 %v452, %v451
    %v495 = vpack.c.bf16 %v454, %v453
    %v500 = vunpack.c.l.b16 %v455
    %v501 = vunpack.c.l.b16 %v456
    %v502 = vunpack.c.l.b16 %v457
    %v503 = vunpack.c.l.b16 %v458
    %v504 = vpack.c.b16 %v501, %v500
    %v505 = vpack.c.b16 %v503, %v502
    %vm506 = vcmask 392192
    %v508 = vsel %vm506, %v504, 0
    %v511 = vsel %vm506, %v505, 0
    %513 = vmatpush.bf16.msra.mxu0 0
    %514 = vmatpush.bf16.msra.mxu0 0
    %515 = vmatpush.bf16.msra.mxu0 0
    %516 = vmatpush.bf16.msra.mxu0 0
    %517 = vmatpush.bf16.msra.mxu0 0
    %518 = vmatpush.bf16.msra.mxu0 %v495
    %519 = vmatpush.bf16.msra.mxu0 %v494
    %520 = vmatpush.bf16.msra.mxu0 %v493
    %521 = vmatmul.bf16.gmra.mxu0 %v508
    %v522 = vpop.f32.mrf.mxu0
    %v523 = vadd.f32 0.0, %v522
    %v524 = vpop.f32.mrf.mxu0
    %v525 = vadd.f32 0.0, %v524
    %526 = vmatmul.bf16.gmra.mxu0 %v511
    %v527 = vpop.f32.mrf.mxu0
    %v528 = vadd.f32 0.0, %v527
    %v529 = vpop.f32.mrf.mxu0
    %v530 = vadd.f32 0.0, %v529
    %531 = vdwg.mxu0
    %v532 = vpack.c.bf16 %v525, %v523
    %v533 = vpack.c.bf16 %v530, %v528
    %v535 = vperm.slane %v475, 0
    %v553 = vunpack.c.l.b16 %v459
    %v554 = vunpack.c.l.b16 %v460
    %v555 = vunpack.c.l.b16 %v461
    %v556 = vunpack.c.l.b16 %v462
    %v557 = vunpack.c.l.b16 %v463
    %v558 = vunpack.c.l.b16 %v464
    %v559 = vunpack.c.l.b16 %v465
    %v560 = vunpack.c.l.b16 %v466
    %v561 = vunpack.c.l.b16 %v467
    %v562 = vunpack.c.l.b16 %v468
    %v563 = vunpack.c.l.b16 %v469
    %v564 = vunpack.c.l.b16 %v470
    %v565 = vunpack.c.l.b16 %v471
    %v566 = vunpack.c.l.b16 %v472
    %v567 = vunpack.c.l.b16 %v473
    %v568 = vunpack.c.l.b16 %v474
    %v569 = vpack.c.b16 %v554, %v553
    %v570 = vpack.c.b16 %v556, %v555
    %v571 = vpack.c.b16 %v558, %v557
    %v572 = vpack.c.b16 %v560, %v559
    %v573 = vpack.c.b16 %v562, %v561
    %v574 = vpack.c.b16 %v564, %v563
    %v575 = vpack.c.b16 %v566, %v565
    %v576 = vpack.c.b16 %v568, %v567
    %585 = vmatpush.bf16.msra.mxu0 %v576
    %586 = vmatpush.bf16.msra.mxu0 %v575
    %587 = vmatpush.bf16.msra.mxu0 %v574
    %588 = vmatpush.bf16.msra.mxu0 %v573
    %589 = vmatpush.bf16.msra.mxu0 %v572
    %590 = vmatpush.bf16.msra.mxu0 %v571
    %591 = vmatpush.bf16.msra.mxu0 %v570
    %592 = vmatpush.bf16.msra.mxu0 %v569
    %593 = vmatmul.bf16.gmra.mxu0 %v532
    %v594 = vpop.f32.mrf.mxu0
    %v595 = vadd.f32 %v535, %v594
    %v596 = vpop.f32.mrf.mxu0
    %v597 = vadd.f32 %v535, %v596
    %598 = vmatmul.bf16.gmra.mxu0 %v533
    %v599 = vpop.f32.mrf.mxu0
    %v600 = vadd.f32 %v535, %v599
    %v601 = vpop.f32.mrf.mxu0
    %v602 = vadd.f32 %v535, %v601
    %603 = vdwg.mxu0
    %v604 = vmax.f32 %v595, 0.0
    %v605 = vmax.f32 %v597, 0.0
    %v606 = vmax.f32 %v600, 0.0
    %v607 = vmax.f32 %v602, 0.0
    %v609 = vperm.slane %v492, 0
    %v627 = vunpack.c.l.b16 %v476
    %v628 = vunpack.c.l.b16 %v477
    %v629 = vunpack.c.l.b16 %v478
    %v630 = vunpack.c.l.b16 %v479
    %v631 = vunpack.c.l.b16 %v480
    %v632 = vunpack.c.l.b16 %v481
    %v633 = vunpack.c.l.b16 %v482
    %v634 = vunpack.c.l.b16 %v483
    %v635 = vunpack.c.l.b16 %v484
    %v636 = vunpack.c.l.b16 %v485
    %v637 = vunpack.c.l.b16 %v486
    %v638 = vunpack.c.l.b16 %v487
    %v639 = vunpack.c.l.b16 %v488
    %v640 = vunpack.c.l.b16 %v489
    %v641 = vunpack.c.l.b16 %v490
    %v642 = vunpack.c.l.b16 %v491
    %v643 = vpack.c.b16 %v628, %v627
    %v644 = vpack.c.b16 %v630, %v629
    %v645 = vpack.c.b16 %v632, %v631
    %v646 = vpack.c.b16 %v634, %v633
    %v647 = vpack.c.b16 %v636, %v635
    %v648 = vpack.c.b16 %v638, %v637
    %v649 = vpack.c.b16 %v640, %v639
    %v650 = vpack.c.b16 %v642, %v641
    %659 = vmatpush.bf16.msra.mxu0 %v650
    %660 = vmatpush.bf16.msra.mxu0 %v649
    %661 = vmatpush.bf16.msra.mxu0 %v648
    %662 = vmatpush.bf16.msra.mxu0 %v647
    %663 = vmatpush.bf16.msra.mxu0 %v646
    %664 = vmatpush.bf16.msra.mxu0 %v645
    %665 = vmatpush.bf16.msra.mxu0 %v644
    %666 = vmatpush.bf16.msra.mxu0 %v643
    %667 = vmatmul.bf16.gmra.mxu0 %v493
    %v668 = vpop.f32.mrf.mxu0
    %v669 = vadd.f32 %v609, %v668
    %v670 = vpop.f32.mrf.mxu0
    %v671 = vadd.f32 %v609, %v670
    %672 = vmatmul.bf16.gmra.mxu0 %v494
    %v673 = vpop.f32.mrf.mxu0
    %v674 = vadd.f32 %v609, %v673
    %v675 = vpop.f32.mrf.mxu0
    %v676 = vadd.f32 %v609, %v675
    %677 = vdwg.mxu0
    %v678 = vadd.f32 %v604, %v669
    %v679 = vadd.f32 %v605, %v671
    %v680 = vadd.f32 %v606, %v674
    %v681 = vadd.f32 %v607, %v676
    %v682 = vld [vmem:[#allocation7] sm:$0xf]
    %v683 = vld [vmem:[#allocation7 + $0x4] sm:$0xf]
    %v684 = vld [vmem:[#allocation16] sm:$0xf]
    %v685 = vld [vmem:[#allocation16 + $0x4] sm:$0xf]
    %v686 = vld [vmem:[#allocation16 + $0x8] sm:$0xf]
    %v687 = vld [vmem:[#allocation16 + $0xc] sm:$0xf]
    %v688 = vld [vmem:[#allocation16 + $0x10] sm:$0xf]
    %v689 = vld [vmem:[#allocation16 + $0x14] sm:$0xf]
    %v690 = vld [vmem:[#allocation16 + $0x18] sm:$0xf]
    %v691 = vld [vmem:[#allocation16 + $0x1c] sm:$0xf]
    %v692 = vld [vmem:[#allocation16 + $0x20] sm:$0xf]
    %v693 = vld [vmem:[#allocation16 + $0x24] sm:$0xf]
    %v694 = vld [vmem:[#allocation16 + $0x28] sm:$0xf]
    %v695 = vld [vmem:[#allocation16 + $0x2c] sm:$0xf]
    %v696 = vld [vmem:[#allocation16 + $0x30] sm:$0xf]
    %v697 = vld [vmem:[#allocation16 + $0x34] sm:$0xf]
    %v698 = vld [vmem:[#allocation16 + $0x38] sm:$0xf]
    %v699 = vld [vmem:[#allocation16 + $0x3c] sm:$0xf]
    %v700 = vld [vmem:[%s13] sm:$0x1]
    %v701 = vpack.c.bf16 %v679, %v678
    %v702 = vpack.c.bf16 %v681, %v680
    %v705 = vunpack.c.l.b16 %v682
    %v706 = vunpack.c.l.b16 %v683
    %v707 = vpack.c.b16 %v706, %v705
    %vm708 = vcmask 261120
    %v710 = vsel %vm708, %v707, 0
    %712 = vmatpush.bf16.msra.mxu0 0
    %713 = vmatpush.bf16.msra.mxu0 0
    %714 = vmatpush.bf16.msra.mxu0 0
    %715 = vmatpush.bf16.msra.mxu0 0
    %716 = vmatpush.bf16.msra.mxu0 0
    %717 = vmatpush.bf16.msra.mxu0 0
    %718 = vmatpush.bf16.msra.mxu0 %v702
    %719 = vmatpush.bf16.msra.mxu0 %v701
    %720 = vmatmul.bf16.gmra.mxu0 %v710
    %v721 = vpop.f32.mrf.mxu0
    %v722 = vadd.f32 0.0, %v721
    %v723 = vpop.f32.mrf.mxu0
    %v724 = vadd.f32 0.0, %v723
    %725 = vdwg.mxu0
    %v726 = vpack.c.bf16 %v724, %v722
    %v728 = vperm.slane %v700, 0
    %v746 = vunpack.c.l.b16 %v684
    %v747 = vunpack.c.l.b16 %v685
    %v748 = vunpack.c.l.b16 %v686
    %v749 = vunpack.c.l.b16 %v687
    %v750 = vunpack.c.l.b16 %v688
    %v751 = vunpack.c.l.b16 %v689
    %v752 = vunpack.c.l.b16 %v690
    %v753 = vunpack.c.l.b16 %v691
    %v754 = vunpack.c.l.b16 %v692
    %v755 = vunpack.c.l.b16 %v693
    %v756 = vunpack.c.l.b16 %v694
    %v757 = vunpack.c.l.b16 %v695
    %v758 = vunpack.c.l.b16 %v696
    %v759 = vunpack.c.l.b16 %v697
    %v760 = vunpack.c.l.b16 %v698
    %v761 = vunpack.c.l.b16 %v699
    %v762 = vpack.c.b16 %v747, %v746
    %v763 = vpack.c.b16 %v749, %v748
    %v764 = vpack.c.b16 %v751, %v750
    %v765 = vpack.c.b16 %v753, %v752
    %v766 = vpack.c.b16 %v755, %v754
    %v767 = vpack.c.b16 %v757, %v756
    %v768 = vpack.c.b16 %v759, %v758
    %v769 = vpack.c.b16 %v761, %v760
    %778 = vmatpush.bf16.msra.mxu0 %v769
    %779 = vmatpush.bf16.msra.mxu0 %v768
    %780 = vmatpush.bf16.msra.mxu0 %v767
    %781 = vmatpush.bf16.msra.mxu0 %v766
    %782 = vmatpush.bf16.msra.mxu0 %v765
    %783 = vmatpush.bf16.msra.mxu0 %v764
    %784 = vmatpush.bf16.msra.mxu0 %v763
    %785 = vmatpush.bf16.msra.mxu0 %v762
    %786 = vmatmul.bf16.gmra.mxu0 %v726
    %v787 = vpop.f32.mrf.mxu0
    %v788 = vadd.f32 %v728, %v787
    %v789 = vpop.f32.mrf.mxu0
    %v790 = vadd.f32 %v728, %v789
    %791 = vdwg.mxu0
    %v792 = vadd.f32 %v788, %v678
    %v793 = vadd.f32 %v790, %v679
    %794 = vst [vmem:[#allocation17] sm:$0xff] %v792
    %795 = vst [vmem:[#allocation17 + $0x8] sm:$0xff] %v793
    // Predicated region
    $region94: #{tpu_custom_call.1} parent=1 // pred_check
      _
    $region95: #{tpu_custom_call.1} parent=1 // pred_check_branch
      %797 = sbr.rel (0) target = $region97
    $region96: #{tpu_custom_call.1} parent=1 // pred_region
      %799 = vsyncadd [#allocation4], 0
      %s800 = sshll.u32 [#allocation17], 4
      %s801 = int_to_ptr.vmem [resolvable:$true] %s800
      %s802 = sshll.u32 %s14, 4
      %s803 = int_to_ptr.hbm [resolvable:$true] %s802
      %808 = dma.vmem_to_hbm [thread:$0]  %s801, 256, %s803, [#allocation4], 128, 128, 8
    $region97: #{tpu_custom_call.1} parent=1 // pred_fallthru
      _
    // Predicated region
    $region98: #{tpu_custom_call.1} parent=1 // pred_check
      _
    $region99: #{tpu_custom_call.1} parent=1 // pred_check_branch
      %810 = sbr.rel (0) target = $region101
    $region100: #{tpu_custom_call.1} parent=1 // pred_region
      %812 = dma.done [#allocation4], 256
    $region101: #{tpu_custom_call.1} parent=1 // pred_fallthru
      _
    %813 = vsyncpa [#allocation3], 1
    %814 = vsyncpa [#allocation6], 1
    %815 = vsyncpa [#allocation9], 1
    %816 = vsyncpa [#allocation12], 1
    %817 = vsyncpa [#allocation15], 1
    %818 = vsyncpa [#allocation4], 1

</llo_original>
